<compile_context>
chip_gen: v7x
topology: tpu7x:2x2x1
jax: 0.10.0
libtpu: 0.0.40
codegen_flags: <defaults>
</compile_context>

<pallas_src>
import jax
import jax.numpy as jnp
from jax.experimental import pallas as pl
from jax.experimental.pallas import tpu as pltpu

_LANE = 128  # vreg lane width


def _round_up(x, m):
    return ((x + m - 1) // m) * m


def _pad2d(a, rows, cols):
    # jnp.pad defaults to constant zeros -- required (see NOTE above).
    return jnp.pad(a, ((0, rows - a.shape[0]), (0, cols - a.shape[1])))


def _pick_tile(n_p, preferred):
    """Largest multiple of 128 <= preferred that divides n_p (n_p % 128 == 0)."""
    t = min(preferred, n_p)
    while n_p % t:
        t -= _LANE
    return t


def _vmem_capacity_bytes():
    try:
        return int(pltpu.get_tpu_info().vmem_capacity_bytes)
    except Exception:
        return 64 * 1024 * 1024  # conservative: v7x per-TC VMEM


def gcn_layer_kernel(a_ref, x_ref, w_ref, b_ref, o_ref, acc_ref):
    """One grid step of relu((A @ X) @ W + b).

    a_ref : (TM, TK)    bf16  tile of A_hat (streamed over the grid)
    x_ref : (N_p, C_in) bf16  node features, fully VMEM-resident
    w_ref : (C_in, C_out) bf16 weights (resident), b_ref : (1, C_out) f32
    o_ref : (TM, C_out) output row tile
    acc_ref: (TM, C_in) f32 scratch accumulating A @ X over the k axis
    """
    k = pl.program_id(1)
    tk = a_ref.shape[1]

    @pl.when(k == 0)
    def _():
        acc_ref[...] = jnp.zeros_like(acc_ref)

    # Slice the k-th row block of the resident feature matrix.
    start = pl.multiple_of(k * tk, tk)
    x_blk = x_ref[pl.ds(start, tk), :]                      # (TK, C_in) bf16
    acc_ref[...] += jnp.dot(a_ref[...], x_blk,
                            preferred_element_type=jnp.float32)

    @pl.when(k == pl.num_programs(1) - 1)
    def _():
        xw = jnp.dot(acc_ref[...].astype(jnp.bfloat16), w_ref[...],
                     preferred_element_type=jnp.float32)
        # f32 bias + ReLU epilogue on the VPU (v5e has no bf16 VPU).
        o_ref[...] = jnp.maximum(xw + b_ref[...], 0.0).astype(o_ref.dtype)


def _gcn_layer(a_bf16, x_bf16, w_bf16, b_f32, out_dtype):
    """One GCNConv + ReLU layer: relu(A_hat @ X @ W + b), tiled pallas_call."""
    n_p = a_bf16.shape[0]
    c_in = x_bf16.shape[1]
    c_out = w_bf16.shape[1]

    tm = _pick_tile(n_p, 256)   # 256-aligned row tiles when possible
    tk = _pick_tile(n_p, 512)   # long contraction chunks
    grid = (n_p // tm, n_p // tk)

    # VMEM working set: double-buffered inputs + output block + f32 scratch.
    work = (2 * tm * tk * 2            # A tiles (bf16, 2 buffers)
            + 2 * n_p * c_in * 2       # resident features (bf16)
            + 2 * c_in * c_out * 2     # weights (bf16)
            + 2 * c_out * 4            # bias (f32)
            + 2 * tm * c_out * 4       # output block
            + tm * c_in * 4)           # accumulator scratch
    vmem_limit = int(min(max(2 * work, 32 * 1024 * 1024),
                         int(0.8 * _vmem_capacity_bytes())))

    out_itemsize = jnp.dtype(out_dtype).itemsize
    flops = 2 * n_p * n_p * c_in + 2 * n_p * c_in * c_out
    bytes_accessed = (2 * (n_p * n_p + n_p * c_in + c_in * c_out)
                      + 4 * c_out + out_itemsize * n_p * c_out)

    return pl.pallas_call(
        gcn_layer_kernel,
        out_shape=jax.ShapeDtypeStruct((n_p, c_out), out_dtype),
        grid_spec=pltpu.PrefetchScalarGridSpec(
            num_scalar_prefetch=0,
            grid=grid,
            in_specs=[
                pl.BlockSpec((tm, tk), lambda i, k: (i, k)),       # A (streamed)
                pl.BlockSpec((n_p, c_in), lambda i, k: (0, 0)),    # X (resident)
                pl.BlockSpec((c_in, c_out), lambda i, k: (0, 0)),  # W (resident)
                pl.BlockSpec((1, c_out), lambda i, k: (0, 0)),     # bias
            ],
            out_specs=pl.BlockSpec((tm, c_out), lambda i, k: (i, 0)),
            scratch_shapes=[pltpu.VMEM((tm, c_in), jnp.float32)],
        ),
        compiler_params=pltpu.CompilerParams(
            dimension_semantics=("parallel", "arbitrary"),
            vmem_limit_bytes=vmem_limit),
        cost_estimate=pl.CostEstimate(flops=int(flops), transcendentals=0,
                                      bytes_accessed=int(bytes_accessed)),
    )(a_bf16, x_bf16, w_bf16, b_f32)


@jax.jit
def fused_gcn(a_hat, x, w1, b1, w2, b2):
    """Two-layer GCN forward; a_hat is the dense normalized adjacency."""
    n, in_c = x.shape
    hid_c = w1.shape[1]
    out_c = w2.shape[1]

    # Lane-dense, zero padded shapes (last dims multiples of 128).
    n_p = _round_up(n, _LANE)
    in_p = _round_up(in_c, _LANE)
    hid_p = _round_up(hid_c, _LANE)
    out_p = _round_up(out_c, _LANE)

    bf16 = jnp.bfloat16
    a_p = _pad2d(a_hat, n_p, n_p).astype(bf16)   # dominant tensor: bf16 once
    x_p = _pad2d(x, n_p, in_p).astype(bf16)
    w1_p = _pad2d(w1, in_p, hid_p).astype(bf16)
    w2_p = _pad2d(w2, hid_p, out_p).astype(bf16)
    b1_p = _pad2d(b1.reshape(1, hid_c), 1, hid_p)  # f32 epilogue biases
    b2_p = _pad2d(b2.reshape(1, out_c), 1, out_p)

    # Layer 1: h = relu(A @ X @ W1 + b1), stored bf16 (feeds layer 2's MXU).
    h_p = _gcn_layer(a_p, x_p, w1_p, b1_p, out_dtype=bf16)
    # Layer 2: y = relu(A @ h @ W2 + b2), f32 final output.
    y_p = _gcn_layer(a_p, h_p, w2_p, b2_p, out_dtype=jnp.float32)
    return y_p[:n, :out_c]


def build_norm_adj(edge_index, num_nodes):
    """Dense D^{-1/2} (A + I) D^{-1/2}, matching PyG gcn_norm with self-loops.

    XLA glue: built once per (static) graph, hoisted out of the forward pass.
    """
    src = edge_index[0]
    dst = edge_index[1]
    a = jnp.zeros((num_nodes, num_nodes), jnp.float32)
    a = a.at[dst, src].add(1.0)                      # A[i, j] = 1 for edge j -> i
    a = a + jnp.eye(num_nodes, dtype=jnp.float32)    # self loops
    deg = a.sum(axis=1)
    dinv = jnp.where(deg > 0, 1.0 / jnp.sqrt(deg), 0.0)
    return dinv[:, None] * a * dinv[None, :]


def glorot(key, fan_in, fan_out):
    limit = jnp.sqrt(6.0 / (fan_in + fan_out))
    return jax.random.uniform(
        key, (fan_in, fan_out), minval=-limit, maxval=limit, dtype=jnp.float32
    )


def gcn_reference_matched(a_hat, x, w1, b1, w2, b2):
    """Plain-JAX reference mirroring the kernel's dtypes and (A@X)@W order."""
    bf16 = jnp.bfloat16
    a = a_hat.astype(bf16)
    ax = jnp.dot(a, x.astype(bf16), preferred_element_type=jnp.float32)
    h = jnp.maximum(
        jnp.dot(ax.astype(bf16), w1.astype(bf16),
                preferred_element_type=jnp.float32) + b1, 0.0).astype(bf16)
    ah = jnp.dot(a, h, preferred_element_type=jnp.float32)
    return jnp.maximum(
        jnp.dot(ah.astype(bf16), w2.astype(bf16),
                preferred_element_type=jnp.float32) + b2, 0.0)


def gcn_reference_f32(a_hat, x, w1, b1, w2, b2):
    h = jnp.maximum(a_hat @ (x @ w1) + b1, 0.0)
    return jnp.maximum(a_hat @ (h @ w2) + b2, 0.0)


if __name__ == "__main__":
    num_nodes = 16
    in_channels = 8
    hidden_channels = 32
    out_channels = 16

    key = jax.random.PRNGKey(0)
    k_x, k_w1, k_w2 = jax.random.split(key, 3)

    # Deterministic node features.
    x = jax.random.normal(k_x, (num_nodes, in_channels), dtype=jnp.float32)

    # Deterministic bidirectional ring graph: edges (i, i+1) and (i+1, i).
    idx = jnp.arange(num_nodes, dtype=jnp.int32)
    nxt = (idx + 1) % num_nodes
    src = jnp.concatenate([idx, nxt])
    dst = jnp.concatenate([nxt, idx])
    edge_index = jnp.stack([src, dst], axis=0)  # [2, 2*num_nodes]

    # Parameters (GCNConv: glorot weight, zero bias).
    params = {
        "w1": glorot(k_w1, in_channels, hidden_channels),
        "b1": jnp.zeros((hidden_channels,), jnp.float32),
        "w2": glorot(k_w2, hidden_channels, out_channels),
        "b2": jnp.zeros((out_channels,), jnp.float32),
    }

    # Static graph: build + normalize the adjacency ONCE (hoisted out of forward).
    a_hat = build_norm_adj(edge_index, num_nodes)

    out = fused_gcn(a_hat, x, params["w1"], params["b1"],
                    params["w2"], params["b2"])
    jax.block_until_ready(out)

    # Tight check against a reference with identical bf16/f32 math and op order.
    ref_bf16 = gcn_reference_matched(a_hat, x, params["w1"], params["b1"],
                                     params["w2"], params["b2"])
    # Coarse sanity check against the full-f32 reference (bf16 MXU inputs).
    ref_f32 = gcn_reference_f32(a_hat, x, params["w1"], params["b1"],
                                params["w2"], params["b2"])

    assert out.shape == (num_nodes, out_channels)
    assert jnp.allclose(out, ref_bf16, atol=2e-3, rtol=2e-3)
    assert jnp.allclose(out, ref_f32, atol=1e-1, rtol=1e-1)

    print("KERNEL_OK")
</pallas_src>

<mosaic_0001>
module attributes {stable_mosaic.version = 11 : i64} {
  func.func @gcn_layer_kernel(%arg0: i32, %arg1: i32, %arg2: memref<128x128xbf16, #tpu.memory_space<vmem>>, %arg3: memref<128x128xbf16, #tpu.memory_space<vmem>>, %arg4: memref<128x128xbf16, #tpu.memory_space<vmem>>, %arg5: memref<1x128xf32, #tpu.memory_space<vmem>>, %arg6: memref<128x128xbf16, #tpu.memory_space<vmem>>, %arg7: memref<128x128xf32, #tpu.memory_space<vmem>>) attributes {dimension_semantics = [#tpu.dimension_semantics<parallel>, #tpu.dimension_semantics<arbitrary>], iteration_bounds = array<i64: 1, 1>, scalar_prefetch = 0 : i64, scratch_operands = 1 : i64, tpu.core_type = #tpu.core_type<tc>, window_params = [{transform_indices = @transform_0, window_bounds = array<i64: 128, 128>}, {pipeline_mode = #tpu.pipeline_mode<synchronous>, transform_indices = @transform_1, window_bounds = array<i64: 128, 128>}, {pipeline_mode = #tpu.pipeline_mode<synchronous>, transform_indices = @transform_2, window_bounds = array<i64: 128, 128>}, {pipeline_mode = #tpu.pipeline_mode<synchronous>, transform_indices = @transform_3, window_bounds = array<i64: 1, 128>}, {transform_indices = @transform_4, window_bounds = array<i64: 128, 128>}]} {
    %c0_i32 = arith.constant 0 : i32
    %0 = arith.cmpi eq, %arg1, %c0_i32 : i32
    %1 = arith.extui %0 : i1 to i32
    %c0_i32_0 = arith.constant 0 : i32
    %2 = arith.cmpi ne, %1, %c0_i32_0 : i32
    scf.if %2 {
      %cst_9 = arith.constant 0.000000e+00 : f32
      %15 = vector.broadcast %cst_9 : f32 to vector<128x128xf32>
      %c0_10 = arith.constant 0 : index
      %c0_11 = arith.constant 0 : index
      %16 = vector.load %arg7[%c0_10, %c0_11] : memref<128x128xf32, #tpu.memory_space<vmem>>, vector<128x128xf32>
      tpu.vector_store %arg7[%c0_10, %c0_11], %15 {strides = array<i32>} : memref<128x128xf32, #tpu.memory_space<vmem>>, vector<128x128xf32>,
    } else {
    }
    %c128_i32 = arith.constant 128 : i32
    %3 = arith.muli %arg1, %c128_i32 : i32
    %4 = tpu.assume_multiple %3, 128 : i32
    %5 = arith.index_cast %4 : i32 to index
    %c0 = arith.constant 0 : index
    %6 = vector.load %arg3[%5, %c0] : memref<128x128xbf16, #tpu.memory_space<vmem>>, vector<128x128xbf16>
    %c0_1 = arith.constant 0 : index
    %c0_2 = arith.constant 0 : index
    %7 = vector.load %arg7[%c0_1, %c0_2] : memref<128x128xf32, #tpu.memory_space<vmem>>, vector<128x128xf32>
    %c0_3 = arith.constant 0 : index
    %c0_4 = arith.constant 0 : index
    %8 = vector.load %arg2[%c0_3, %c0_4] : memref<128x128xbf16, #tpu.memory_space<vmem>>, vector<128x128xbf16>
    %cst = arith.constant dense<0.000000e+00> : vector<128x128xf32>
    %9 = tpu.matmul %8, %6, %cst {dimension_numbers = #tpu.dot_dimension_numbers<[1], [0], [0], [1], [0, 0, 1, 1], [], []>} : vector<128x128xbf16>, vector<128x128xbf16>, vector<128x128xf32> -> vector<128x128xf32>
    %10 = arith.addf %7, %9 : vector<128x128xf32>
    %c0_5 = arith.constant 0 : index
    %c0_6 = arith.constant 0 : index
    %11 = vector.load %arg7[%c0_5, %c0_6] : memref<128x128xf32, #tpu.memory_space<vmem>>, vector<128x128xf32>
    tpu.vector_store %arg7[%c0_5, %c0_6], %10 {strides = array<i32>} : memref<128x128xf32, #tpu.memory_space<vmem>>, vector<128x128xf32>,
    %c0_i32_7 = arith.constant 0 : i32
    %12 = arith.cmpi eq, %arg1, %c0_i32_7 : i32
    %13 = arith.extui %12 : i1 to i32
    %c0_i32_8 = arith.constant 0 : i32
    %14 = arith.cmpi ne, %13, %c0_i32_8 : i32
    scf.if %14 {
      %c0_9 = arith.constant 0 : index
      %c0_10 = arith.constant 0 : index
      %15 = vector.load %arg7[%c0_9, %c0_10] : memref<128x128xf32, #tpu.memory_space<vmem>>, vector<128x128xf32>
      %16 = arith.truncf %15 : vector<128x128xf32> to vector<128x128xbf16>
      %c0_11 = arith.constant 0 : index
      %c0_12 = arith.constant 0 : index
      %17 = vector.load %arg4[%c0_11, %c0_12] : memref<128x128xbf16, #tpu.memory_space<vmem>>, vector<128x128xbf16>
      %cst_13 = arith.constant dense<0.000000e+00> : vector<128x128xf32>
      %18 = tpu.matmul %16, %17, %cst_13 {dimension_numbers = #tpu.dot_dimension_numbers<[1], [0], [0], [1], [0, 0, 1, 1], [], []>} : vector<128x128xbf16>, vector<128x128xbf16>, vector<128x128xf32> -> vector<128x128xf32>
      %c0_14 = arith.constant 0 : index
      %c0_15 = arith.constant 0 : index
      %19 = vector.load %arg5[%c0_14, %c0_15] : memref<1x128xf32, #tpu.memory_space<vmem>>, vector<1x128xf32>
      %20 = vector.broadcast %19 : vector<1x128xf32> to vector<128x128xf32>
      %21 = arith.addf %18, %20 : vector<128x128xf32>
      %cst_16 = arith.constant 0.000000e+00 : f32
      %22 = vector.broadcast %cst_16 : f32 to vector<128x128xf32>
      %23 = arith.maximumf %21, %22 : vector<128x128xf32>
      %24 = arith.truncf %23 : vector<128x128xf32> to vector<128x128xbf16>
      %c0_17 = arith.constant 0 : index
      %c0_18 = arith.constant 0 : index
      %25 = vector.load %arg6[%c0_17, %c0_18] : memref<128x128xbf16, #tpu.memory_space<vmem>>, vector<128x128xbf16>
      tpu.vector_store %arg6[%c0_17, %c0_18], %24 {strides = array<i32>} : memref<128x128xbf16, #tpu.memory_space<vmem>>, vector<128x128xbf16>,
    } else {
    }
    return
  }
  func.func @transform_0(%arg0: i32, %arg1: i32) -> (i32, i32) {
    %c0_i32 = arith.constant 0 : i32
    return %arg0, %arg1 : i32, i32
  }
  func.func @transform_1(%arg0: i32, %arg1: i32) -> (i32, i32) {
    %c0_i32 = arith.constant 0 : i32
    %c0_i32_0 = arith.constant 0 : i32
    %c0_i32_1 = arith.constant 0 : i32
    return %c0_i32, %c0_i32_0 : i32, i32
  }
  func.func @transform_2(%arg0: i32, %arg1: i32) -> (i32, i32) {
    %c0_i32 = arith.constant 0 : i32
    %c0_i32_0 = arith.constant 0 : i32
    %c0_i32_1 = arith.constant 0 : i32
    return %c0_i32, %c0_i32_0 : i32, i32
  }
  func.func @transform_3(%arg0: i32, %arg1: i32) -> (i32, i32) {
    %c0_i32 = arith.constant 0 : i32
    %c0_i32_0 = arith.constant 0 : i32
    %c0_i32_1 = arith.constant 0 : i32
    return %c0_i32, %c0_i32_0 : i32, i32
  }
  func.func @transform_4(%arg0: i32, %arg1: i32) -> (i32, i32) {
    %c0_i32 = arith.constant 0 : i32
    %c0_i32_0 = arith.constant 0 : i32
    return %arg0, %c0_i32 : i32, i32
  }
}

module attributes {stable_mosaic.version = 11 : i64} {
  func.func @gcn_layer_kernel(%arg0: i32, %arg1: i32, %arg2: memref<128x128xbf16, #tpu.memory_space<vmem>>, %arg3: memref<128x128xbf16, #tpu.memory_space<vmem>>, %arg4: memref<128x128xbf16, #tpu.memory_space<vmem>>, %arg5: memref<1x128xf32, #tpu.memory_space<vmem>>, %arg6: memref<128x128xf32, #tpu.memory_space<vmem>>, %arg7: memref<128x128xf32, #tpu.memory_space<vmem>>) attributes {dimension_semantics = [#tpu.dimension_semantics<parallel>, #tpu.dimension_semantics<arbitrary>], iteration_bounds = array<i64: 1, 1>, scalar_prefetch = 0 : i64, scratch_operands = 1 : i64, tpu.core_type = #tpu.core_type<tc>, window_params = [{transform_indices = @transform_0, window_bounds = array<i64: 128, 128>}, {pipeline_mode = #tpu.pipeline_mode<synchronous>, transform_indices = @transform_1, window_bounds = array<i64: 128, 128>}, {pipeline_mode = #tpu.pipeline_mode<synchronous>, transform_indices = @transform_2, window_bounds = array<i64: 128, 128>}, {pipeline_mode = #tpu.pipeline_mode<synchronous>, transform_indices = @transform_3, window_bounds = array<i64: 1, 128>}, {transform_indices = @transform_4, window_bounds = array<i64: 128, 128>}]} {
    %c0_i32 = arith.constant 0 : i32
    %0 = arith.cmpi eq, %arg1, %c0_i32 : i32
    %1 = arith.extui %0 : i1 to i32
    %c0_i32_0 = arith.constant 0 : i32
    %2 = arith.cmpi ne, %1, %c0_i32_0 : i32
    scf.if %2 {
      %cst_9 = arith.constant 0.000000e+00 : f32
      %15 = vector.broadcast %cst_9 : f32 to vector<128x128xf32>
      %c0_10 = arith.constant 0 : index
      %c0_11 = arith.constant 0 : index
      %16 = vector.load %arg7[%c0_10, %c0_11] : memref<128x128xf32, #tpu.memory_space<vmem>>, vector<128x128xf32>
      tpu.vector_store %arg7[%c0_10, %c0_11], %15 {strides = array<i32>} : memref<128x128xf32, #tpu.memory_space<vmem>>, vector<128x128xf32>,
    } else {
    }
    %c128_i32 = arith.constant 128 : i32
    %3 = arith.muli %arg1, %c128_i32 : i32
    %4 = tpu.assume_multiple %3, 128 : i32
    %5 = arith.index_cast %4 : i32 to index
    %c0 = arith.constant 0 : index
    %6 = vector.load %arg3[%5, %c0] : memref<128x128xbf16, #tpu.memory_space<vmem>>, vector<128x128xbf16>
    %c0_1 = arith.constant 0 : index
    %c0_2 = arith.constant 0 : index
    %7 = vector.load %arg7[%c0_1, %c0_2] : memref<128x128xf32, #tpu.memory_space<vmem>>, vector<128x128xf32>
    %c0_3 = arith.constant 0 : index
    %c0_4 = arith.constant 0 : index
    %8 = vector.load %arg2[%c0_3, %c0_4] : memref<128x128xbf16, #tpu.memory_space<vmem>>, vector<128x128xbf16>
    %cst = arith.constant dense<0.000000e+00> : vector<128x128xf32>
    %9 = tpu.matmul %8, %6, %cst {dimension_numbers = #tpu.dot_dimension_numbers<[1], [0], [0], [1], [0, 0, 1, 1], [], []>} : vector<128x128xbf16>, vector<128x128xbf16>, vector<128x128xf32> -> vector<128x128xf32>
    %10 = arith.addf %7, %9 : vector<128x128xf32>
    %c0_5 = arith.constant 0 : index
    %c0_6 = arith.constant 0 : index
    %11 = vector.load %arg7[%c0_5, %c0_6] : memref<128x128xf32, #tpu.memory_space<vmem>>, vector<128x128xf32>
    tpu.vector_store %arg7[%c0_5, %c0_6], %10 {strides = array<i32>} : memref<128x128xf32, #tpu.memory_space<vmem>>, vector<128x128xf32>,
    %c0_i32_7 = arith.constant 0 : i32
    %12 = arith.cmpi eq, %arg1, %c0_i32_7 : i32
    %13 = arith.extui %12 : i1 to i32
    %c0_i32_8 = arith.constant 0 : i32
    %14 = arith.cmpi ne, %13, %c0_i32_8 : i32
    scf.if %14 {
      %c0_9 = arith.constant 0 : index
      %c0_10 = arith.constant 0 : index
      %15 = vector.load %arg7[%c0_9, %c0_10] : memref<128x128xf32, #tpu.memory_space<vmem>>, vector<128x128xf32>
      %16 = arith.truncf %15 : vector<128x128xf32> to vector<128x128xbf16>
      %c0_11 = arith.constant 0 : index
      %c0_12 = arith.constant 0 : index
      %17 = vector.load %arg4[%c0_11, %c0_12] : memref<128x128xbf16, #tpu.memory_space<vmem>>, vector<128x128xbf16>
      %cst_13 = arith.constant dense<0.000000e+00> : vector<128x128xf32>
      %18 = tpu.matmul %16, %17, %cst_13 {dimension_numbers = #tpu.dot_dimension_numbers<[1], [0], [0], [1], [0, 0, 1, 1], [], []>} : vector<128x128xbf16>, vector<128x128xbf16>, vector<128x128xf32> -> vector<128x128xf32>
      %c0_14 = arith.constant 0 : index
      %c0_15 = arith.constant 0 : index
      %19 = vector.load %arg5[%c0_14, %c0_15] : memref<1x128xf32, #tpu.memory_space<vmem>>, vector<1x128xf32>
      %20 = vector.broadcast %19 : vector<1x128xf32> to vector<128x128xf32>
      %21 = arith.addf %18, %20 : vector<128x128xf32>
      %cst_16 = arith.constant 0.000000e+00 : f32
      %22 = vector.broadcast %cst_16 : f32 to vector<128x128xf32>
      %23 = arith.maximumf %21, %22 : vector<128x128xf32>
      %c0_17 = arith.constant 0 : index
      %c0_18 = arith.constant 0 : index
      %24 = vector.load %arg6[%c0_17, %c0_18] : memref<128x128xf32, #tpu.memory_space<vmem>>, vector<128x128xf32>
      tpu.vector_store %arg6[%c0_17, %c0_18], %23 {strides = array<i32>} : memref<128x128xf32, #tpu.memory_space<vmem>>, vector<128x128xf32>,
    } else {
    }
    return
  }
  func.func @transform_0(%arg0: i32, %arg1: i32) -> (i32, i32) {
    %c0_i32 = arith.constant 0 : i32
    return %arg0, %arg1 : i32, i32
  }
  func.func @transform_1(%arg0: i32, %arg1: i32) -> (i32, i32) {
    %c0_i32 = arith.constant 0 : i32
    %c0_i32_0 = arith.constant 0 : i32
    %c0_i32_1 = arith.constant 0 : i32
    return %c0_i32, %c0_i32_0 : i32, i32
  }
  func.func @transform_2(%arg0: i32, %arg1: i32) -> (i32, i32) {
    %c0_i32 = arith.constant 0 : i32
    %c0_i32_0 = arith.constant 0 : i32
    %c0_i32_1 = arith.constant 0 : i32
    return %c0_i32, %c0_i32_0 : i32, i32
  }
  func.func @transform_3(%arg0: i32, %arg1: i32) -> (i32, i32) {
    %c0_i32 = arith.constant 0 : i32
    %c0_i32_0 = arith.constant 0 : i32
    %c0_i32_1 = arith.constant 0 : i32
    return %c0_i32, %c0_i32_0 : i32, i32
  }
  func.func @transform_4(%arg0: i32, %arg1: i32) -> (i32, i32) {
    %c0_i32 = arith.constant 0 : i32
    %c0_i32_0 = arith.constant 0 : i32
    return %arg0, %c0_i32 : i32, i32
  }
}

</mosaic_0001>

<llo_original>
// kernel: fused_gcn.2
$region0: #{fused_gcn.2}
  #allocation0 [shape = 'u32[]', space=smem, size = 0x4, offset = 0x4, fixed_abs, tag = 'smem constant byte address 0x4 - core index']
  #allocation1 [shape = 'u32[144,128]{1,0:T(1,128)}', space=vmem, size = 0x12000, scoped, tag = 'internal scratch']
  #allocation2 [shape = 'f32[128,128]{1,0:T(8,128)}', space=vmem, size = 0x10000, scoped, tag = 'scratch operand']
  %s0 = inlined_call_operand.vmem [shape: bf16[128,128], index: 0, kind: input, shape index: {}]
  %s1 = inlined_call_operand.vmem [shape: bf16[128,128], index: 1, kind: input, shape index: {}]
  %s2 = inlined_call_operand.vmem [shape: bf16[128,128], index: 2, kind: input, shape index: {}]
  %s3 = inlined_call_operand.vmem [shape: f32[1,128], index: 3, kind: input, shape index: {}]
  %s4 = inlined_call_operand.vmem [shape: bf16[128,128], index: 4, kind: output, shape index: {}]
  %s5 = sld [smem:[#allocation0]]
  $region34: #{fused_gcn.2} parent=0
    _
  %s7 = ssub.s32 1, %s5
  %s8 = scalar_select 0, %s7, %s5
  // Predicated region
  $region2: #{fused_gcn.2} parent=0 // pred_check
    _
  $region3: #{fused_gcn.2} parent=0 // pred_check_branch
    %10 = sbr.rel (0) target = $region5
  $region4: #{fused_gcn.2} parent=0 // pred_region
    _
  $region5: #{fused_gcn.2} parent=0 // pred_fallthru
    _
  // Predicated region
  $region6: #{fused_gcn.2} parent=0 // pred_check
    _
  $region7: #{fused_gcn.2} parent=0 // pred_check_branch
    %12 = sbr.rel (0) target = $region9
  $region8: #{fused_gcn.2} parent=0 // pred_region
    _
  $region9: #{fused_gcn.2} parent=0 // pred_fallthru
    _
  // Predicated region
  $region10: #{fused_gcn.2} parent=0 // pred_check
    _
  $region11: #{fused_gcn.2} parent=0 // pred_check_branch
    %14 = sbr.rel (0) target = $region13
  $region12: #{fused_gcn.2} parent=0 // pred_region
    _
  $region13: #{fused_gcn.2} parent=0 // pred_fallthru
    _
  // Predicated region
  $region14: #{fused_gcn.2} parent=0 // pred_check
    _
  $region15: #{fused_gcn.2} parent=0 // pred_check_branch
    %16 = sbr.rel (0) target = $region17
  $region16: #{fused_gcn.2} parent=0 // pred_region
    _
  $region17: #{fused_gcn.2} parent=0 // pred_fallthru
    _
  %p18 = scmp.eq.s32.totalorder 0, 0
  // Predicated region
  $region18: #{fused_gcn.2} parent=0 // pred_check
    %p19 = pneg %p18
  $region19: #{fused_gcn.2} parent=0 // pred_check_branch
    %21 = sbr.rel (%p19) target = $region21
  $region20: #{fused_gcn.2} parent=0 // pred_region
    %22 = vst [vmem:[#allocation2] sm:$0xff] 0.0
    %23 = vst [vmem:[#allocation2 + $0x8] sm:$0xff] 0.0
    %24 = vst [vmem:[#allocation2 + $0x10] sm:$0xff] 0.0
    %25 = vst [vmem:[#allocation2 + $0x18] sm:$0xff] 0.0
    %26 = vst [vmem:[#allocation2 + $0x20] sm:$0xff] 0.0
    %27 = vst [vmem:[#allocation2 + $0x28] sm:$0xff] 0.0
    %28 = vst [vmem:[#allocation2 + $0x30] sm:$0xff] 0.0
    %29 = vst [vmem:[#allocation2 + $0x38] sm:$0xff] 0.0
    %30 = vst [vmem:[#allocation2 + $0x40] sm:$0xff] 0.0
    %31 = vst [vmem:[#allocation2 + $0x48] sm:$0xff] 0.0
    %32 = vst [vmem:[#allocation2 + $0x50] sm:$0xff] 0.0
    %33 = vst [vmem:[#allocation2 + $0x58] sm:$0xff] 0.0
    %34 = vst [vmem:[#allocation2 + $0x60] sm:$0xff] 0.0
    %35 = vst [vmem:[#allocation2 + $0x68] sm:$0xff] 0.0
    %36 = vst [vmem:[#allocation2 + $0x70] sm:$0xff] 0.0
    %37 = vst [vmem:[#allocation2 + $0x78] sm:$0xff] 0.0
  $region21: #{fused_gcn.2} parent=0 // pred_fallthru
    _
  %s38 = smul.u32 0, 128
  %s39 = sshra.s32 %s38, 3
  %s40 = sand.u32 %s38, 7
  %s41 = smul.addr %s39, 4
  %s42 = scalar_lea.vmem %s1, %s41
  %v43 = vld [vmem:[%s42] sm:$0xf]
  %v44 = vld [vmem:[%s42 + $0x4] sm:$0xf]
  %v45 = vld [vmem:[%s42 + $0x8] sm:$0xf]
  %v46 = vld [vmem:[%s42 + $0xc] sm:$0xf]
  %v47 = vld [vmem:[%s42 + $0x10] sm:$0xf]
  %v48 = vld [vmem:[%s42 + $0x14] sm:$0xf]
  %v49 = vld [vmem:[%s42 + $0x18] sm:$0xf]
  %v50 = vld [vmem:[%s42 + $0x1c] sm:$0xf]
  %v51 = vld [vmem:[%s42 + $0x20] sm:$0xf]
  %v52 = vld [vmem:[%s42 + $0x24] sm:$0xf]
  %v53 = vld [vmem:[%s42 + $0x28] sm:$0xf]
  %v54 = vld [vmem:[%s42 + $0x2c] sm:$0xf]
  %v55 = vld [vmem:[%s42 + $0x30] sm:$0xf]
  %v56 = vld [vmem:[%s42 + $0x34] sm:$0xf]
  %v57 = vld [vmem:[%s42 + $0x38] sm:$0xf]
  %v58 = vld [vmem:[%s42 + $0x3c] sm:$0xf]
  %v59 = vld [vmem:[#allocation2] sm:$0xff]
  %v60 = vld [vmem:[#allocation2 + $0x8] sm:$0xff]
  %v61 = vld [vmem:[#allocation2 + $0x10] sm:$0xff]
  %v62 = vld [vmem:[#allocation2 + $0x18] sm:$0xff]
  %v63 = vld [vmem:[#allocation2 + $0x20] sm:$0xff]
  %v64 = vld [vmem:[#allocation2 + $0x28] sm:$0xff]
  %v65 = vld [vmem:[#allocation2 + $0x30] sm:$0xff]
  %v66 = vld [vmem:[#allocation2 + $0x38] sm:$0xff]
  %v67 = vld [vmem:[#allocation2 + $0x40] sm:$0xff]
  %v68 = vld [vmem:[#allocation2 + $0x48] sm:$0xff]
  %v69 = vld [vmem:[#allocation2 + $0x50] sm:$0xff]
  %v70 = vld [vmem:[#allocation2 + $0x58] sm:$0xff]
  %v71 = vld [vmem:[#allocation2 + $0x60] sm:$0xff]
  %v72 = vld [vmem:[#allocation2 + $0x68] sm:$0xff]
  %v73 = vld [vmem:[#allocation2 + $0x70] sm:$0xff]
  %v74 = vld [vmem:[#allocation2 + $0x78] sm:$0xff]
  %v75 = vld [vmem:[%s0] sm:$0xf]
  %v76 = vld [vmem:[%s0 + $0x4] sm:$0xf]
  %v77 = vld [vmem:[%s0 + $0x8] sm:$0xf]
  %v78 = vld [vmem:[%s0 + $0xc] sm:$0xf]
  %v79 = vld [vmem:[%s0 + $0x10] sm:$0xf]
  %v80 = vld [vmem:[%s0 + $0x14] sm:$0xf]
  %v81 = vld [vmem:[%s0 + $0x18] sm:$0xf]
  %v82 = vld [vmem:[%s0 + $0x1c] sm:$0xf]
  %v83 = vld [vmem:[%s0 + $0x20] sm:$0xf]
  %v84 = vld [vmem:[%s0 + $0x24] sm:$0xf]
  %v85 = vld [vmem:[%s0 + $0x28] sm:$0xf]
  %v86 = vld [vmem:[%s0 + $0x2c] sm:$0xf]
  %v87 = vld [vmem:[%s0 + $0x30] sm:$0xf]
  %v88 = vld [vmem:[%s0 + $0x34] sm:$0xf]
  %v89 = vld [vmem:[%s0 + $0x38] sm:$0xf]
  %v90 = vld [vmem:[%s0 + $0x3c] sm:$0xf]
  %v107 = vunpack.c.l.b16 %v75
  %v108 = vunpack.c.l.b16 %v76
  %v109 = vunpack.c.l.b16 %v77
  %v110 = vunpack.c.l.b16 %v78
  %v111 = vunpack.c.l.b16 %v79
  %v112 = vunpack.c.l.b16 %v80
  %v113 = vunpack.c.l.b16 %v81
  %v114 = vunpack.c.l.b16 %v82
  %v115 = vunpack.c.l.b16 %v83
  %v116 = vunpack.c.l.b16 %v84
  %v117 = vunpack.c.l.b16 %v85
  %v118 = vunpack.c.l.b16 %v86
  %v119 = vunpack.c.l.b16 %v87
  %v120 = vunpack.c.l.b16 %v88
  %v121 = vunpack.c.l.b16 %v89
  %v122 = vunpack.c.l.b16 %v90
  %v123 = vpack.c.b16 %v108, %v107
  %v124 = vpack.c.b16 %v110, %v109
  %v125 = vpack.c.b16 %v112, %v111
  %v126 = vpack.c.b16 %v114, %v113
  %v127 = vpack.c.b16 %v116, %v115
  %v128 = vpack.c.b16 %v118, %v117
  %v129 = vpack.c.b16 %v120, %v119
  %v130 = vpack.c.b16 %v122, %v121
  %v155 = vunpack.c.l.b16 %v43
  %v156 = vunpack.c.l.b16 %v44
  %v157 = vunpack.c.l.b16 %v45
  %v158 = vunpack.c.l.b16 %v46
  %v159 = vunpack.c.l.b16 %v47
  %v160 = vunpack.c.l.b16 %v48
  %v161 = vunpack.c.l.b16 %v49
  %v162 = vunpack.c.l.b16 %v50
  %v163 = vunpack.c.l.b16 %v51
  %v164 = vunpack.c.l.b16 %v52
  %v165 = vunpack.c.l.b16 %v53
  %v166 = vunpack.c.l.b16 %v54
  %v167 = vunpack.c.l.b16 %v55
  %v168 = vunpack.c.l.b16 %v56
  %v169 = vunpack.c.l.b16 %v57
  %v170 = vunpack.c.l.b16 %v58
  %v171 = vpack.c.b16 %v156, %v155
  %v172 = vpack.c.b16 %v158, %v157
  %v173 = vpack.c.b16 %v160, %v159
  %v174 = vpack.c.b16 %v162, %v161
  %v175 = vpack.c.b16 %v164, %v163
  %v176 = vpack.c.b16 %v166, %v165
  %v177 = vpack.c.b16 %v168, %v167
  %v178 = vpack.c.b16 %v170, %v169
  %187 = vmatprep.subr.bf16.mxu0 0
  %188 = vmatpush1.bf16.msra.mxu0 %v171
  %189 = vmatprep.subr.bf16.mxu0 0
  %190 = vmatpush1.bf16.msra.mxu0 %v172
  %191 = vmatprep.subr.bf16.mxu0 0
  %192 = vmatpush1.bf16.msra.mxu0 %v173
  %193 = vmatprep.subr.bf16.mxu0 0
  %194 = vmatpush1.bf16.msra.mxu0 %v174
  %195 = vmatprep.subr.bf16.mxu0 0
  %196 = vmatpush1.bf16.msra.mxu0 %v175
  %197 = vmatprep.subr.bf16.mxu0 0
  %198 = vmatpush1.bf16.msra.mxu0 %v176
  %199 = vmatprep.subr.bf16.mxu0 0
  %200 = vmatpush1.bf16.msra.mxu0 %v177
  %201 = vmatprep.subr.bf16.mxu0 0
  %202 = vmatpush1.bf16.msra.mxu0 %v178
  %203 = vmatprep.subr.bf16.mxu0 0
  %204 = vmatpush1.bf16.msra.mxu0 0
  %205 = vmatprep.subr.bf16.mxu0 0
  %206 = vmatpush1.bf16.msra.mxu0 0
  %207 = vmatprep.subr.bf16.mxu0 0
  %208 = vmatpush1.bf16.msra.mxu0 0
  %209 = vmatprep.subr.bf16.mxu0 0
  %210 = vmatpush1.bf16.msra.mxu0 0
  %211 = vmatprep.subr.bf16.mxu0 0
  %212 = vmatpush1.bf16.msra.mxu0 0
  %213 = vmatprep.subr.bf16.mxu0 0
  %214 = vmatpush1.bf16.msra.mxu0 0
  %215 = vmatprep.subr.bf16.mxu0 0
  %216 = vmatpush1.bf16.msra.mxu0 0
  %217 = vmatprep.subr.bf16.mxu0 0
  %218 = vmatpush1.bf16.msra.mxu0 0
  %219 = vmatprep.mubr.bf16.mxu0 0
  %220 = vmatmul.mubr.bf16.gmra.mrb[0].mxu0 %v123
  %v221 = vpop.f32.mrb[0].mxu0
  %v222 = vadd.f32 0.0, %v221
  %v223 = vpop.f32.mrb[0].mxu0
  %v224 = vpop.f32.mrb[0].mxu0
  %v225 = vadd.f32 0.0, %v224
  %v226 = vpop.f32.mrb[0].mxu0
  %227 = vmatprep.mubr.bf16.mxu0 0
  %228 = vmatmul.mubr.bf16.gmra.mrb[0].mxu0 %v124
  %v229 = vpop.f32.mrb[0].mxu0
  %v230 = vadd.f32 0.0, %v229
  %v231 = vpop.f32.mrb[0].mxu0
  %v232 = vpop.f32.mrb[0].mxu0
  %v233 = vadd.f32 0.0, %v232
  %v234 = vpop.f32.mrb[0].mxu0
  %235 = vmatprep.mubr.bf16.mxu0 0
  %236 = vmatmul.mubr.bf16.gmra.mrb[0].mxu0 %v125
  %v237 = vpop.f32.mrb[0].mxu0
  %v238 = vadd.f32 0.0, %v237
  %v239 = vpop.f32.mrb[0].mxu0
  %v240 = vpop.f32.mrb[0].mxu0
  %v241 = vadd.f32 0.0, %v240
  %v242 = vpop.f32.mrb[0].mxu0
  %243 = vmatprep.mubr.bf16.mxu0 0
  %244 = vmatmul.mubr.bf16.gmra.mrb[0].mxu0 %v126
  %v245 = vpop.f32.mrb[0].mxu0
  %v246 = vadd.f32 0.0, %v245
  %v247 = vpop.f32.mrb[0].mxu0
  %v248 = vpop.f32.mrb[0].mxu0
  %v249 = vadd.f32 0.0, %v248
  %v250 = vpop.f32.mrb[0].mxu0
  %251 = vmatprep.mubr.bf16.mxu0 0
  %252 = vmatmul.mubr.bf16.gmra.mrb[0].mxu0 %v127
  %v253 = vpop.f32.mrb[0].mxu0
  %v254 = vadd.f32 0.0, %v253
  %v255 = vpop.f32.mrb[0].mxu0
  %v256 = vpop.f32.mrb[0].mxu0
  %v257 = vadd.f32 0.0, %v256
  %v258 = vpop.f32.mrb[0].mxu0
  %259 = vmatprep.mubr.bf16.mxu0 0
  %260 = vmatmul.mubr.bf16.gmra.mrb[0].mxu0 %v128
  %v261 = vpop.f32.mrb[0].mxu0
  %v262 = vadd.f32 0.0, %v261
  %v263 = vpop.f32.mrb[0].mxu0
  %v264 = vpop.f32.mrb[0].mxu0
  %v265 = vadd.f32 0.0, %v264
  %v266 = vpop.f32.mrb[0].mxu0
  %267 = vmatprep.mubr.bf16.mxu0 0
  %268 = vmatmul.mubr.bf16.gmra.mrb[0].mxu0 %v129
  %v269 = vpop.f32.mrb[0].mxu0
  %v270 = vadd.f32 0.0, %v269
  %v271 = vpop.f32.mrb[0].mxu0
  %v272 = vpop.f32.mrb[0].mxu0
  %v273 = vadd.f32 0.0, %v272
  %v274 = vpop.f32.mrb[0].mxu0
  %275 = vmatprep.mubr.bf16.mxu0 0
  %276 = vmatmul.mubr.bf16.gmra.mrb[0].mxu0 %v130
  %v277 = vpop.f32.mrb[0].mxu0
  %v278 = vadd.f32 0.0, %v277
  %v279 = vpop.f32.mrb[0].mxu0
  %v280 = vpop.f32.mrb[0].mxu0
  %v281 = vadd.f32 0.0, %v280
  %v282 = vpop.f32.mrb[0].mxu0
  %283 = vdwg.mxu0
  %v284 = vadd.f32 %v59, %v222
  %v285 = vadd.f32 %v60, %v225
  %v286 = vadd.f32 %v61, %v230
  %v287 = vadd.f32 %v62, %v233
  %v288 = vadd.f32 %v63, %v238
  %v289 = vadd.f32 %v64, %v241
  %v290 = vadd.f32 %v65, %v246
  %v291 = vadd.f32 %v66, %v249
  %v292 = vadd.f32 %v67, %v254
  %v293 = vadd.f32 %v68, %v257
  %v294 = vadd.f32 %v69, %v262
  %v295 = vadd.f32 %v70, %v265
  %v296 = vadd.f32 %v71, %v270
  %v297 = vadd.f32 %v72, %v273
  %v298 = vadd.f32 %v73, %v278
  %v299 = vadd.f32 %v74, %v281
  %300 = vst [vmem:[#allocation2] sm:$0xff] %v284
  %301 = vst [vmem:[#allocation2 + $0x8] sm:$0xff] %v285
  %302 = vst [vmem:[#allocation2 + $0x10] sm:$0xff] %v286
  %303 = vst [vmem:[#allocation2 + $0x18] sm:$0xff] %v287
  %304 = vst [vmem:[#allocation2 + $0x20] sm:$0xff] %v288
  %305 = vst [vmem:[#allocation2 + $0x28] sm:$0xff] %v289
  %306 = vst [vmem:[#allocation2 + $0x30] sm:$0xff] %v290
  %307 = vst [vmem:[#allocation2 + $0x38] sm:$0xff] %v291
  %308 = vst [vmem:[#allocation2 + $0x40] sm:$0xff] %v292
  %309 = vst [vmem:[#allocation2 + $0x48] sm:$0xff] %v293
  %310 = vst [vmem:[#allocation2 + $0x50] sm:$0xff] %v294
  %311 = vst [vmem:[#allocation2 + $0x58] sm:$0xff] %v295
  %312 = vst [vmem:[#allocation2 + $0x60] sm:$0xff] %v296
  %313 = vst [vmem:[#allocation2 + $0x68] sm:$0xff] %v297
  %314 = vst [vmem:[#allocation2 + $0x70] sm:$0xff] %v298
  %315 = vst [vmem:[#allocation2 + $0x78] sm:$0xff] %v299
  // Predicated region
  $region22: #{fused_gcn.2} parent=0 // pred_check
    %p316 = pneg %p18
  $region23: #{fused_gcn.2} parent=0 // pred_check_branch
    %318 = sbr.rel (%p316) target = $region25
  $region24: #{fused_gcn.2} parent=0 // pred_region
    %v319 = vld [vmem:[#allocation2] sm:$0xff]
    %v320 = vld [vmem:[#allocation2 + $0x8] sm:$0xff]
    %v321 = vld [vmem:[#allocation2 + $0x10] sm:$0xff]
    %v322 = vld [vmem:[#allocation2 + $0x18] sm:$0xff]
    %v323 = vld [vmem:[#allocation2 + $0x20] sm:$0xff]
    %v324 = vld [vmem:[#allocation2 + $0x28] sm:$0xff]
    %v325 = vld [vmem:[#allocation2 + $0x30] sm:$0xff]
    %v326 = vld [vmem:[#allocation2 + $0x38] sm:$0xff]
    %v327 = vld [vmem:[#allocation2 + $0x40] sm:$0xff]
    %v328 = vld [vmem:[#allocation2 + $0x48] sm:$0xff]
    %v329 = vld [vmem:[#allocation2 + $0x50] sm:$0xff]
    %v330 = vld [vmem:[#allocation2 + $0x58] sm:$0xff]
    %v331 = vld [vmem:[#allocation2 + $0x60] sm:$0xff]
    %v332 = vld [vmem:[#allocation2 + $0x68] sm:$0xff]
    %v333 = vld [vmem:[#allocation2 + $0x70] sm:$0xff]
    %v334 = vld [vmem:[#allocation2 + $0x78] sm:$0xff]
    %v335 = vpack.c.bf16 %v320, %v319
    %v336 = vpack.c.bf16 %v322, %v321
    %v337 = vpack.c.bf16 %v324, %v323
    %v338 = vpack.c.bf16 %v326, %v325
    %v339 = vpack.c.bf16 %v328, %v327
    %v340 = vpack.c.bf16 %v330, %v329
    %v341 = vpack.c.bf16 %v332, %v331
    %v342 = vpack.c.bf16 %v334, %v333
    %v343 = vld [vmem:[%s2] sm:$0xf]
    %v344 = vld [vmem:[%s2 + $0x4] sm:$0xf]
    %v345 = vld [vmem:[%s2 + $0x8] sm:$0xf]
    %v346 = vld [vmem:[%s2 + $0xc] sm:$0xf]
    %v347 = vld [vmem:[%s2 + $0x10] sm:$0xf]
    %v348 = vld [vmem:[%s2 + $0x14] sm:$0xf]
    %v349 = vld [vmem:[%s2 + $0x18] sm:$0xf]
    %v350 = vld [vmem:[%s2 + $0x1c] sm:$0xf]
    %v351 = vld [vmem:[%s2 + $0x20] sm:$0xf]
    %v352 = vld [vmem:[%s2 + $0x24] sm:$0xf]
    %v353 = vld [vmem:[%s2 + $0x28] sm:$0xf]
    %v354 = vld [vmem:[%s2 + $0x2c] sm:$0xf]
    %v355 = vld [vmem:[%s2 + $0x30] sm:$0xf]
    %v356 = vld [vmem:[%s2 + $0x34] sm:$0xf]
    %v357 = vld [vmem:[%s2 + $0x38] sm:$0xf]
    %v358 = vld [vmem:[%s2 + $0x3c] sm:$0xf]
    %v359 = vld [vmem:[%s3] sm:$0x1]
    %v361 = vlaneseq
    %v362 = vshrl.u32 %v361, 7
    %v363 = vsub.s32 0, %v362
    %v364 = vrot.slane %v359, %v363
    %v382 = vunpack.c.l.b16 %v343
    %v383 = vunpack.c.l.b16 %v344
    %v384 = vunpack.c.l.b16 %v345
    %v385 = vunpack.c.l.b16 %v346
    %v386 = vunpack.c.l.b16 %v347
    %v387 = vunpack.c.l.b16 %v348
    %v388 = vunpack.c.l.b16 %v349
    %v389 = vunpack.c.l.b16 %v350
    %v390 = vunpack.c.l.b16 %v351
    %v391 = vunpack.c.l.b16 %v352
    %v392 = vunpack.c.l.b16 %v353
    %v393 = vunpack.c.l.b16 %v354
    %v394 = vunpack.c.l.b16 %v355
    %v395 = vunpack.c.l.b16 %v356
    %v396 = vunpack.c.l.b16 %v357
    %v397 = vunpack.c.l.b16 %v358
    %v398 = vpack.c.b16 %v383, %v382
    %v399 = vpack.c.b16 %v385, %v384
    %v400 = vpack.c.b16 %v387, %v386
    %v401 = vpack.c.b16 %v389, %v388
    %v402 = vpack.c.b16 %v391, %v390
    %v403 = vpack.c.b16 %v393, %v392
    %v404 = vpack.c.b16 %v395, %v394
    %v405 = vpack.c.b16 %v397, %v396
    %414 = vmatprep.subr.bf16.mxu0 0
    %415 = vmatpush1.bf16.msra.mxu0 %v398
    %416 = vmatprep.subr.bf16.mxu0 0
    %417 = vmatpush1.bf16.msra.mxu0 %v399
    %418 = vmatprep.subr.bf16.mxu0 0
    %419 = vmatpush1.bf16.msra.mxu0 %v400
    %420 = vmatprep.subr.bf16.mxu0 0
    %421 = vmatpush1.bf16.msra.mxu0 %v401
    %422 = vmatprep.subr.bf16.mxu0 0
    %423 = vmatpush1.bf16.msra.mxu0 %v402
    %424 = vmatprep.subr.bf16.mxu0 0
    %425 = vmatpush1.bf16.msra.mxu0 %v403
    %426 = vmatprep.subr.bf16.mxu0 0
    %427 = vmatpush1.bf16.msra.mxu0 %v404
    %428 = vmatprep.subr.bf16.mxu0 0
    %429 = vmatpush1.bf16.msra.mxu0 %v405
    %430 = vmatprep.subr.bf16.mxu0 0
    %431 = vmatpush1.bf16.msra.mxu0 0
    %432 = vmatprep.subr.bf16.mxu0 0
    %433 = vmatpush1.bf16.msra.mxu0 0
    %434 = vmatprep.subr.bf16.mxu0 0
    %435 = vmatpush1.bf16.msra.mxu0 0
    %436 = vmatprep.subr.bf16.mxu0 0
    %437 = vmatpush1.bf16.msra.mxu0 0
    %438 = vmatprep.subr.bf16.mxu0 0
    %439 = vmatpush1.bf16.msra.mxu0 0
    %440 = vmatprep.subr.bf16.mxu0 0
    %441 = vmatpush1.bf16.msra.mxu0 0
    %442 = vmatprep.subr.bf16.mxu0 0
    %443 = vmatpush1.bf16.msra.mxu0 0
    %444 = vmatprep.subr.bf16.mxu0 0
    %445 = vmatpush1.bf16.msra.mxu0 0
    %446 = vmatprep.mubr.bf16.mxu0 0
    %447 = vmatmul.mubr.bf16.gmra.mrb[0].mxu0 %v335
    %v448 = vpop.f32.mrb[0].mxu0
    %v449 = vadd.f32 %v364, %v448
    %v450 = vpop.f32.mrb[0].mxu0
    %v451 = vpop.f32.mrb[0].mxu0
    %v452 = vadd.f32 %v364, %v451
    %v453 = vpop.f32.mrb[0].mxu0
    %454 = vmatprep.mubr.bf16.mxu0 0
    %455 = vmatmul.mubr.bf16.gmra.mrb[0].mxu0 %v336
    %v456 = vpop.f32.mrb[0].mxu0
    %v457 = vadd.f32 %v364, %v456
    %v458 = vpop.f32.mrb[0].mxu0
    %v459 = vpop.f32.mrb[0].mxu0
    %v460 = vadd.f32 %v364, %v459
    %v461 = vpop.f32.mrb[0].mxu0
    %462 = vmatprep.mubr.bf16.mxu0 0
    %463 = vmatmul.mubr.bf16.gmra.mrb[0].mxu0 %v337
    %v464 = vpop.f32.mrb[0].mxu0
    %v465 = vadd.f32 %v364, %v464
    %v466 = vpop.f32.mrb[0].mxu0
    %v467 = vpop.f32.mrb[0].mxu0
    %v468 = vadd.f32 %v364, %v467
    %v469 = vpop.f32.mrb[0].mxu0
    %470 = vmatprep.mubr.bf16.mxu0 0
    %471 = vmatmul.mubr.bf16.gmra.mrb[0].mxu0 %v338
    %v472 = vpop.f32.mrb[0].mxu0
    %v473 = vadd.f32 %v364, %v472
    %v474 = vpop.f32.mrb[0].mxu0
    %v475 = vpop.f32.mrb[0].mxu0
    %v476 = vadd.f32 %v364, %v475
    %v477 = vpop.f32.mrb[0].mxu0
    %478 = vmatprep.mubr.bf16.mxu0 0
    %479 = vmatmul.mubr.bf16.gmra.mrb[0].mxu0 %v339
    %v480 = vpop.f32.mrb[0].mxu0
    %v481 = vadd.f32 %v364, %v480
    %v482 = vpop.f32.mrb[0].mxu0
    %v483 = vpop.f32.mrb[0].mxu0
    %v484 = vadd.f32 %v364, %v483
    %v485 = vpop.f32.mrb[0].mxu0
    %486 = vmatprep.mubr.bf16.mxu0 0
    %487 = vmatmul.mubr.bf16.gmra.mrb[0].mxu0 %v340
    %v488 = vpop.f32.mrb[0].mxu0
    %v489 = vadd.f32 %v364, %v488
    %v490 = vpop.f32.mrb[0].mxu0
    %v491 = vpop.f32.mrb[0].mxu0
    %v492 = vadd.f32 %v364, %v491
    %v493 = vpop.f32.mrb[0].mxu0
    %494 = vmatprep.mubr.bf16.mxu0 0
    %495 = vmatmul.mubr.bf16.gmra.mrb[0].mxu0 %v341
    %v496 = vpop.f32.mrb[0].mxu0
    %v497 = vadd.f32 %v364, %v496
    %v498 = vpop.f32.mrb[0].mxu0
    %v499 = vpop.f32.mrb[0].mxu0
    %v500 = vadd.f32 %v364, %v499
    %v501 = vpop.f32.mrb[0].mxu0
    %502 = vmatprep.mubr.bf16.mxu0 0
    %503 = vmatmul.mubr.bf16.gmra.mrb[0].mxu0 %v342
    %v504 = vpop.f32.mrb[0].mxu0
    %v505 = vadd.f32 %v364, %v504
    %v506 = vpop.f32.mrb[0].mxu0
    %v507 = vpop.f32.mrb[0].mxu0
    %v508 = vadd.f32 %v364, %v507
    %v509 = vpop.f32.mrb[0].mxu0
    %510 = vdwg.mxu0
    %v511 = vmax.f32 %v449, 0.0
    %v512 = vmax.f32 %v452, 0.0
    %v513 = vmax.f32 %v457, 0.0
    %v514 = vmax.f32 %v460, 0.0
    %v515 = vmax.f32 %v465, 0.0
    %v516 = vmax.f32 %v468, 0.0
    %v517 = vmax.f32 %v473, 0.0
    %v518 = vmax.f32 %v476, 0.0
    %v519 = vmax.f32 %v481, 0.0
    %v520 = vmax.f32 %v484, 0.0
    %v521 = vmax.f32 %v489, 0.0
    %v522 = vmax.f32 %v492, 0.0
    %v523 = vmax.f32 %v497, 0.0
    %v524 = vmax.f32 %v500, 0.0
    %v525 = vmax.f32 %v505, 0.0
    %v526 = vmax.f32 %v508, 0.0
    %v527 = vpack.c.bf16 %v512, %v511
    %v528 = vpack.c.bf16 %v514, %v513
    %v529 = vpack.c.bf16 %v516, %v515
    %v530 = vpack.c.bf16 %v518, %v517
    %v531 = vpack.c.bf16 %v520, %v519
    %v532 = vpack.c.bf16 %v522, %v521
    %v533 = vpack.c.bf16 %v524, %v523
    %v534 = vpack.c.bf16 %v526, %v525
    %v543 = vunpack.c.l.b16 %v527
    %v544 = vunpack.c.h.b16 %v527
    %v545 = vunpack.c.l.b16 %v528
    %v546 = vunpack.c.h.b16 %v528
    %v547 = vunpack.c.l.b16 %v529
    %v548 = vunpack.c.h.b16 %v529
    %v549 = vunpack.c.l.b16 %v530
    %v550 = vunpack.c.h.b16 %v530
    %v551 = vunpack.c.l.b16 %v531
    %v552 = vunpack.c.h.b16 %v531
    %v553 = vunpack.c.l.b16 %v532
    %v554 = vunpack.c.h.b16 %v532
    %v555 = vunpack.c.l.b16 %v533
    %v556 = vunpack.c.h.b16 %v533
    %v557 = vunpack.c.l.b16 %v534
    %v558 = vunpack.c.h.b16 %v534
    %v559 = vpack.c.b16 %v543, %v543
    %v560 = vpack.c.b16 %v544, %v544
    %v561 = vpack.c.b16 %v545, %v545
    %v562 = vpack.c.b16 %v546, %v546
    %v563 = vpack.c.b16 %v547, %v547
    %v564 = vpack.c.b16 %v548, %v548
    %v565 = vpack.c.b16 %v549, %v549
    %v566 = vpack.c.b16 %v550, %v550
    %v567 = vpack.c.b16 %v551, %v551
    %v568 = vpack.c.b16 %v552, %v552
    %v569 = vpack.c.b16 %v553, %v553
    %v570 = vpack.c.b16 %v554, %v554
    %v571 = vpack.c.b16 %v555, %v555
    %v572 = vpack.c.b16 %v556, %v556
    %v573 = vpack.c.b16 %v557, %v557
    %v574 = vpack.c.b16 %v558, %v558
    %591 = vst [vmem:[%s4] sm:$0xf] %v559
    %592 = vst [vmem:[%s4 + $0x4] sm:$0xf] %v560
    %593 = vst [vmem:[%s4 + $0x8] sm:$0xf] %v561
    %594 = vst [vmem:[%s4 + $0xc] sm:$0xf] %v562
    %595 = vst [vmem:[%s4 + $0x10] sm:$0xf] %v563
    %596 = vst [vmem:[%s4 + $0x14] sm:$0xf] %v564
    %597 = vst [vmem:[%s4 + $0x18] sm:$0xf] %v565
    %598 = vst [vmem:[%s4 + $0x1c] sm:$0xf] %v566
    %599 = vst [vmem:[%s4 + $0x20] sm:$0xf] %v567
    %600 = vst [vmem:[%s4 + $0x24] sm:$0xf] %v568
    %601 = vst [vmem:[%s4 + $0x28] sm:$0xf] %v569
    %602 = vst [vmem:[%s4 + $0x2c] sm:$0xf] %v570
    %603 = vst [vmem:[%s4 + $0x30] sm:$0xf] %v571
    %604 = vst [vmem:[%s4 + $0x34] sm:$0xf] %v572
    %605 = vst [vmem:[%s4 + $0x38] sm:$0xf] %v573
    %606 = vst [vmem:[%s4 + $0x3c] sm:$0xf] %v574
  $region25: #{fused_gcn.2} parent=0 // pred_fallthru
    _
  // Predicated region
  $region26: #{fused_gcn.2} parent=0 // pred_check
    _
  $region27: #{fused_gcn.2} parent=0 // pred_check_branch
    %608 = sbr.rel (0) target = $region29
  $region28: #{fused_gcn.2} parent=0 // pred_region
    _
  $region29: #{fused_gcn.2} parent=0 // pred_fallthru
    _
  // Predicated region
  $region30: #{fused_gcn.2} parent=0 // pred_check
    _
  $region31: #{fused_gcn.2} parent=0 // pred_check_branch
    %610 = sbr.rel (0) target = $region33
  $region32: #{fused_gcn.2} parent=0 // pred_region
    _
  $region33: #{fused_gcn.2} parent=0 // pred_fallthru
    _

// kernel: fused_gcn.3
$region0: #{fused_gcn.3}
  #allocation0 [shape = 'u32[]', space=smem, size = 0x4, offset = 0x4, fixed_abs, tag = 'smem constant byte address 0x4 - core index']
  #allocation1 [shape = 'u32[144,128]{1,0:T(1,128)}', space=vmem, size = 0x12000, scoped, tag = 'internal scratch']
  #allocation2 [shape = 'f32[128,128]{1,0:T(8,128)}', space=vmem, size = 0x10000, scoped, tag = 'scratch operand']
  %s0 = inlined_call_operand.vmem [shape: bf16[128,128], index: 0, kind: input, shape index: {}]
  %s1 = inlined_call_operand.vmem [shape: bf16[128,128], index: 1, kind: input, shape index: {}]
  %s2 = inlined_call_operand.vmem [shape: bf16[128,128], index: 2, kind: input, shape index: {}]
  %s3 = inlined_call_operand.vmem [shape: f32[1,128], index: 3, kind: input, shape index: {}]
  %s4 = inlined_call_operand.vmem [shape: f32[128,128], index: 4, kind: output, shape index: {}]
  %s5 = sld [smem:[#allocation0]]
  $region34: #{fused_gcn.3} parent=0
    _
  %s7 = ssub.s32 1, %s5
  %s8 = scalar_select 0, %s7, %s5
  // Predicated region
  $region2: #{fused_gcn.3} parent=0 // pred_check
    _
  $region3: #{fused_gcn.3} parent=0 // pred_check_branch
    %10 = sbr.rel (0) target = $region5
  $region4: #{fused_gcn.3} parent=0 // pred_region
    _
  $region5: #{fused_gcn.3} parent=0 // pred_fallthru
    _
  // Predicated region
  $region6: #{fused_gcn.3} parent=0 // pred_check
    _
  $region7: #{fused_gcn.3} parent=0 // pred_check_branch
    %12 = sbr.rel (0) target = $region9
  $region8: #{fused_gcn.3} parent=0 // pred_region
    _
  $region9: #{fused_gcn.3} parent=0 // pred_fallthru
    _
  // Predicated region
  $region10: #{fused_gcn.3} parent=0 // pred_check
    _
  $region11: #{fused_gcn.3} parent=0 // pred_check_branch
    %14 = sbr.rel (0) target = $region13
  $region12: #{fused_gcn.3} parent=0 // pred_region
    _
  $region13: #{fused_gcn.3} parent=0 // pred_fallthru
    _
  // Predicated region
  $region14: #{fused_gcn.3} parent=0 // pred_check
    _
  $region15: #{fused_gcn.3} parent=0 // pred_check_branch
    %16 = sbr.rel (0) target = $region17
  $region16: #{fused_gcn.3} parent=0 // pred_region
    _
  $region17: #{fused_gcn.3} parent=0 // pred_fallthru
    _
  %p18 = scmp.eq.s32.totalorder 0, 0
  // Predicated region
  $region18: #{fused_gcn.3} parent=0 // pred_check
    %p19 = pneg %p18
  $region19: #{fused_gcn.3} parent=0 // pred_check_branch
    %21 = sbr.rel (%p19) target = $region21
  $region20: #{fused_gcn.3} parent=0 // pred_region
    %22 = vst [vmem:[#allocation2] sm:$0xff] 0.0
    %23 = vst [vmem:[#allocation2 + $0x8] sm:$0xff] 0.0
    %24 = vst [vmem:[#allocation2 + $0x10] sm:$0xff] 0.0
    %25 = vst [vmem:[#allocation2 + $0x18] sm:$0xff] 0.0
    %26 = vst [vmem:[#allocation2 + $0x20] sm:$0xff] 0.0
    %27 = vst [vmem:[#allocation2 + $0x28] sm:$0xff] 0.0
    %28 = vst [vmem:[#allocation2 + $0x30] sm:$0xff] 0.0
    %29 = vst [vmem:[#allocation2 + $0x38] sm:$0xff] 0.0
    %30 = vst [vmem:[#allocation2 + $0x40] sm:$0xff] 0.0
    %31 = vst [vmem:[#allocation2 + $0x48] sm:$0xff] 0.0
    %32 = vst [vmem:[#allocation2 + $0x50] sm:$0xff] 0.0
    %33 = vst [vmem:[#allocation2 + $0x58] sm:$0xff] 0.0
    %34 = vst [vmem:[#allocation2 + $0x60] sm:$0xff] 0.0
    %35 = vst [vmem:[#allocation2 + $0x68] sm:$0xff] 0.0
    %36 = vst [vmem:[#allocation2 + $0x70] sm:$0xff] 0.0
    %37 = vst [vmem:[#allocation2 + $0x78] sm:$0xff] 0.0
  $region21: #{fused_gcn.3} parent=0 // pred_fallthru
    _
  %s38 = smul.u32 0, 128
  %s39 = sshra.s32 %s38, 3
  %s40 = sand.u32 %s38, 7
  %s41 = smul.addr %s39, 4
  %s42 = scalar_lea.vmem %s1, %s41
  %v43 = vld [vmem:[%s42] sm:$0xf]
  %v44 = vld [vmem:[%s42 + $0x4] sm:$0xf]
  %v45 = vld [vmem:[%s42 + $0x8] sm:$0xf]
  %v46 = vld [vmem:[%s42 + $0xc] sm:$0xf]
  %v47 = vld [vmem:[%s42 + $0x10] sm:$0xf]
  %v48 = vld [vmem:[%s42 + $0x14] sm:$0xf]
  %v49 = vld [vmem:[%s42 + $0x18] sm:$0xf]
  %v50 = vld [vmem:[%s42 + $0x1c] sm:$0xf]
  %v51 = vld [vmem:[%s42 + $0x20] sm:$0xf]
  %v52 = vld [vmem:[%s42 + $0x24] sm:$0xf]
  %v53 = vld [vmem:[%s42 + $0x28] sm:$0xf]
  %v54 = vld [vmem:[%s42 + $0x2c] sm:$0xf]
  %v55 = vld [vmem:[%s42 + $0x30] sm:$0xf]
  %v56 = vld [vmem:[%s42 + $0x34] sm:$0xf]
  %v57 = vld [vmem:[%s42 + $0x38] sm:$0xf]
  %v58 = vld [vmem:[%s42 + $0x3c] sm:$0xf]
  %v59 = vld [vmem:[#allocation2] sm:$0xff]
  %v60 = vld [vmem:[#allocation2 + $0x8] sm:$0xff]
  %v61 = vld [vmem:[#allocation2 + $0x10] sm:$0xff]
  %v62 = vld [vmem:[#allocation2 + $0x18] sm:$0xff]
  %v63 = vld [vmem:[#allocation2 + $0x20] sm:$0xff]
  %v64 = vld [vmem:[#allocation2 + $0x28] sm:$0xff]
  %v65 = vld [vmem:[#allocation2 + $0x30] sm:$0xff]
  %v66 = vld [vmem:[#allocation2 + $0x38] sm:$0xff]
  %v67 = vld [vmem:[#allocation2 + $0x40] sm:$0xff]
  %v68 = vld [vmem:[#allocation2 + $0x48] sm:$0xff]
  %v69 = vld [vmem:[#allocation2 + $0x50] sm:$0xff]
  %v70 = vld [vmem:[#allocation2 + $0x58] sm:$0xff]
  %v71 = vld [vmem:[#allocation2 + $0x60] sm:$0xff]
  %v72 = vld [vmem:[#allocation2 + $0x68] sm:$0xff]
  %v73 = vld [vmem:[#allocation2 + $0x70] sm:$0xff]
  %v74 = vld [vmem:[#allocation2 + $0x78] sm:$0xff]
  %v75 = vld [vmem:[%s0] sm:$0xf]
  %v76 = vld [vmem:[%s0 + $0x4] sm:$0xf]
  %v77 = vld [vmem:[%s0 + $0x8] sm:$0xf]
  %v78 = vld [vmem:[%s0 + $0xc] sm:$0xf]
  %v79 = vld [vmem:[%s0 + $0x10] sm:$0xf]
  %v80 = vld [vmem:[%s0 + $0x14] sm:$0xf]
  %v81 = vld [vmem:[%s0 + $0x18] sm:$0xf]
  %v82 = vld [vmem:[%s0 + $0x1c] sm:$0xf]
  %v83 = vld [vmem:[%s0 + $0x20] sm:$0xf]
  %v84 = vld [vmem:[%s0 + $0x24] sm:$0xf]
  %v85 = vld [vmem:[%s0 + $0x28] sm:$0xf]
  %v86 = vld [vmem:[%s0 + $0x2c] sm:$0xf]
  %v87 = vld [vmem:[%s0 + $0x30] sm:$0xf]
  %v88 = vld [vmem:[%s0 + $0x34] sm:$0xf]
  %v89 = vld [vmem:[%s0 + $0x38] sm:$0xf]
  %v90 = vld [vmem:[%s0 + $0x3c] sm:$0xf]
  %v107 = vunpack.c.l.b16 %v75
  %v108 = vunpack.c.l.b16 %v76
  %v109 = vunpack.c.l.b16 %v77
  %v110 = vunpack.c.l.b16 %v78
  %v111 = vunpack.c.l.b16 %v79
  %v112 = vunpack.c.l.b16 %v80
  %v113 = vunpack.c.l.b16 %v81
  %v114 = vunpack.c.l.b16 %v82
  %v115 = vunpack.c.l.b16 %v83
  %v116 = vunpack.c.l.b16 %v84
  %v117 = vunpack.c.l.b16 %v85
  %v118 = vunpack.c.l.b16 %v86
  %v119 = vunpack.c.l.b16 %v87
  %v120 = vunpack.c.l.b16 %v88
  %v121 = vunpack.c.l.b16 %v89
  %v122 = vunpack.c.l.b16 %v90
  %v123 = vpack.c.b16 %v108, %v107
  %v124 = vpack.c.b16 %v110, %v109
  %v125 = vpack.c.b16 %v112, %v111
  %v126 = vpack.c.b16 %v114, %v113
  %v127 = vpack.c.b16 %v116, %v115
  %v128 = vpack.c.b16 %v118, %v117
  %v129 = vpack.c.b16 %v120, %v119
  %v130 = vpack.c.b16 %v122, %v121
  %v155 = vunpack.c.l.b16 %v43
  %v156 = vunpack.c.l.b16 %v44
  %v157 = vunpack.c.l.b16 %v45
  %v158 = vunpack.c.l.b16 %v46
  %v159 = vunpack.c.l.b16 %v47
  %v160 = vunpack.c.l.b16 %v48
  %v161 = vunpack.c.l.b16 %v49
  %v162 = vunpack.c.l.b16 %v50
  %v163 = vunpack.c.l.b16 %v51
  %v164 = vunpack.c.l.b16 %v52
  %v165 = vunpack.c.l.b16 %v53
  %v166 = vunpack.c.l.b16 %v54
  %v167 = vunpack.c.l.b16 %v55
  %v168 = vunpack.c.l.b16 %v56
  %v169 = vunpack.c.l.b16 %v57
  %v170 = vunpack.c.l.b16 %v58
  %v171 = vpack.c.b16 %v156, %v155
  %v172 = vpack.c.b16 %v158, %v157
  %v173 = vpack.c.b16 %v160, %v159
  %v174 = vpack.c.b16 %v162, %v161
  %v175 = vpack.c.b16 %v164, %v163
  %v176 = vpack.c.b16 %v166, %v165
  %v177 = vpack.c.b16 %v168, %v167
  %v178 = vpack.c.b16 %v170, %v169
  %187 = vmatprep.subr.bf16.mxu0 0
  %188 = vmatpush1.bf16.msra.mxu0 %v171
  %189 = vmatprep.subr.bf16.mxu0 0
  %190 = vmatpush1.bf16.msra.mxu0 %v172
  %191 = vmatprep.subr.bf16.mxu0 0
  %192 = vmatpush1.bf16.msra.mxu0 %v173
  %193 = vmatprep.subr.bf16.mxu0 0
  %194 = vmatpush1.bf16.msra.mxu0 %v174
  %195 = vmatprep.subr.bf16.mxu0 0
  %196 = vmatpush1.bf16.msra.mxu0 %v175
  %197 = vmatprep.subr.bf16.mxu0 0
  %198 = vmatpush1.bf16.msra.mxu0 %v176
  %199 = vmatprep.subr.bf16.mxu0 0
  %200 = vmatpush1.bf16.msra.mxu0 %v177
  %201 = vmatprep.subr.bf16.mxu0 0
  %202 = vmatpush1.bf16.msra.mxu0 %v178
  %203 = vmatprep.subr.bf16.mxu0 0
  %204 = vmatpush1.bf16.msra.mxu0 0
  %205 = vmatprep.subr.bf16.mxu0 0
  %206 = vmatpush1.bf16.msra.mxu0 0
  %207 = vmatprep.subr.bf16.mxu0 0
  %208 = vmatpush1.bf16.msra.mxu0 0
  %209 = vmatprep.subr.bf16.mxu0 0
  %210 = vmatpush1.bf16.msra.mxu0 0
  %211 = vmatprep.subr.bf16.mxu0 0
  %212 = vmatpush1.bf16.msra.mxu0 0
  %213 = vmatprep.subr.bf16.mxu0 0
  %214 = vmatpush1.bf16.msra.mxu0 0
  %215 = vmatprep.subr.bf16.mxu0 0
  %216 = vmatpush1.bf16.msra.mxu0 0
  %217 = vmatprep.subr.bf16.mxu0 0
  %218 = vmatpush1.bf16.msra.mxu0 0
  %219 = vmatprep.mubr.bf16.mxu0 0
  %220 = vmatmul.mubr.bf16.gmra.mrb[0].mxu0 %v123
  %v221 = vpop.f32.mrb[0].mxu0
  %v222 = vadd.f32 0.0, %v221
  %v223 = vpop.f32.mrb[0].mxu0
  %v224 = vpop.f32.mrb[0].mxu0
  %v225 = vadd.f32 0.0, %v224
  %v226 = vpop.f32.mrb[0].mxu0
  %227 = vmatprep.mubr.bf16.mxu0 0
  %228 = vmatmul.mubr.bf16.gmra.mrb[0].mxu0 %v124
  %v229 = vpop.f32.mrb[0].mxu0
  %v230 = vadd.f32 0.0, %v229
  %v231 = vpop.f32.mrb[0].mxu0
  %v232 = vpop.f32.mrb[0].mxu0
  %v233 = vadd.f32 0.0, %v232
  %v234 = vpop.f32.mrb[0].mxu0
  %235 = vmatprep.mubr.bf16.mxu0 0
  %236 = vmatmul.mubr.bf16.gmra.mrb[0].mxu0 %v125
  %v237 = vpop.f32.mrb[0].mxu0
  %v238 = vadd.f32 0.0, %v237
  %v239 = vpop.f32.mrb[0].mxu0
  %v240 = vpop.f32.mrb[0].mxu0
  %v241 = vadd.f32 0.0, %v240
  %v242 = vpop.f32.mrb[0].mxu0
  %243 = vmatprep.mubr.bf16.mxu0 0
  %244 = vmatmul.mubr.bf16.gmra.mrb[0].mxu0 %v126
  %v245 = vpop.f32.mrb[0].mxu0
  %v246 = vadd.f32 0.0, %v245
  %v247 = vpop.f32.mrb[0].mxu0
  %v248 = vpop.f32.mrb[0].mxu0
  %v249 = vadd.f32 0.0, %v248
  %v250 = vpop.f32.mrb[0].mxu0
  %251 = vmatprep.mubr.bf16.mxu0 0
  %252 = vmatmul.mubr.bf16.gmra.mrb[0].mxu0 %v127
  %v253 = vpop.f32.mrb[0].mxu0
  %v254 = vadd.f32 0.0, %v253
  %v255 = vpop.f32.mrb[0].mxu0
  %v256 = vpop.f32.mrb[0].mxu0
  %v257 = vadd.f32 0.0, %v256
  %v258 = vpop.f32.mrb[0].mxu0
  %259 = vmatprep.mubr.bf16.mxu0 0
  %260 = vmatmul.mubr.bf16.gmra.mrb[0].mxu0 %v128
  %v261 = vpop.f32.mrb[0].mxu0
  %v262 = vadd.f32 0.0, %v261
  %v263 = vpop.f32.mrb[0].mxu0
  %v264 = vpop.f32.mrb[0].mxu0
  %v265 = vadd.f32 0.0, %v264
  %v266 = vpop.f32.mrb[0].mxu0
  %267 = vmatprep.mubr.bf16.mxu0 0
  %268 = vmatmul.mubr.bf16.gmra.mrb[0].mxu0 %v129
  %v269 = vpop.f32.mrb[0].mxu0
  %v270 = vadd.f32 0.0, %v269
  %v271 = vpop.f32.mrb[0].mxu0
  %v272 = vpop.f32.mrb[0].mxu0
  %v273 = vadd.f32 0.0, %v272
  %v274 = vpop.f32.mrb[0].mxu0
  %275 = vmatprep.mubr.bf16.mxu0 0
  %276 = vmatmul.mubr.bf16.gmra.mrb[0].mxu0 %v130
  %v277 = vpop.f32.mrb[0].mxu0
  %v278 = vadd.f32 0.0, %v277
  %v279 = vpop.f32.mrb[0].mxu0
  %v280 = vpop.f32.mrb[0].mxu0
  %v281 = vadd.f32 0.0, %v280
  %v282 = vpop.f32.mrb[0].mxu0
  %283 = vdwg.mxu0
  %v284 = vadd.f32 %v59, %v222
  %v285 = vadd.f32 %v60, %v225
  %v286 = vadd.f32 %v61, %v230
  %v287 = vadd.f32 %v62, %v233
  %v288 = vadd.f32 %v63, %v238
  %v289 = vadd.f32 %v64, %v241
  %v290 = vadd.f32 %v65, %v246
  %v291 = vadd.f32 %v66, %v249
  %v292 = vadd.f32 %v67, %v254
  %v293 = vadd.f32 %v68, %v257
  %v294 = vadd.f32 %v69, %v262
  %v295 = vadd.f32 %v70, %v265
  %v296 = vadd.f32 %v71, %v270
  %v297 = vadd.f32 %v72, %v273
  %v298 = vadd.f32 %v73, %v278
  %v299 = vadd.f32 %v74, %v281
  %300 = vst [vmem:[#allocation2] sm:$0xff] %v284
  %301 = vst [vmem:[#allocation2 + $0x8] sm:$0xff] %v285
  %302 = vst [vmem:[#allocation2 + $0x10] sm:$0xff] %v286
  %303 = vst [vmem:[#allocation2 + $0x18] sm:$0xff] %v287
  %304 = vst [vmem:[#allocation2 + $0x20] sm:$0xff] %v288
  %305 = vst [vmem:[#allocation2 + $0x28] sm:$0xff] %v289
  %306 = vst [vmem:[#allocation2 + $0x30] sm:$0xff] %v290
  %307 = vst [vmem:[#allocation2 + $0x38] sm:$0xff] %v291
  %308 = vst [vmem:[#allocation2 + $0x40] sm:$0xff] %v292
  %309 = vst [vmem:[#allocation2 + $0x48] sm:$0xff] %v293
  %310 = vst [vmem:[#allocation2 + $0x50] sm:$0xff] %v294
  %311 = vst [vmem:[#allocation2 + $0x58] sm:$0xff] %v295
  %312 = vst [vmem:[#allocation2 + $0x60] sm:$0xff] %v296
  %313 = vst [vmem:[#allocation2 + $0x68] sm:$0xff] %v297
  %314 = vst [vmem:[#allocation2 + $0x70] sm:$0xff] %v298
  %315 = vst [vmem:[#allocation2 + $0x78] sm:$0xff] %v299
  // Predicated region
  $region22: #{fused_gcn.3} parent=0 // pred_check
    %p316 = pneg %p18
  $region23: #{fused_gcn.3} parent=0 // pred_check_branch
    %318 = sbr.rel (%p316) target = $region25
  $region24: #{fused_gcn.3} parent=0 // pred_region
    %v319 = vld [vmem:[#allocation2] sm:$0xff]
    %v320 = vld [vmem:[#allocation2 + $0x8] sm:$0xff]
    %v321 = vld [vmem:[#allocation2 + $0x10] sm:$0xff]
    %v322 = vld [vmem:[#allocation2 + $0x18] sm:$0xff]
    %v323 = vld [vmem:[#allocation2 + $0x20] sm:$0xff]
    %v324 = vld [vmem:[#allocation2 + $0x28] sm:$0xff]
    %v325 = vld [vmem:[#allocation2 + $0x30] sm:$0xff]
    %v326 = vld [vmem:[#allocation2 + $0x38] sm:$0xff]
    %v327 = vld [vmem:[#allocation2 + $0x40] sm:$0xff]
    %v328 = vld [vmem:[#allocation2 + $0x48] sm:$0xff]
    %v329 = vld [vmem:[#allocation2 + $0x50] sm:$0xff]
    %v330 = vld [vmem:[#allocation2 + $0x58] sm:$0xff]
    %v331 = vld [vmem:[#allocation2 + $0x60] sm:$0xff]
    %v332 = vld [vmem:[#allocation2 + $0x68] sm:$0xff]
    %v333 = vld [vmem:[#allocation2 + $0x70] sm:$0xff]
    %v334 = vld [vmem:[#allocation2 + $0x78] sm:$0xff]
    %v335 = vpack.c.bf16 %v320, %v319
    %v336 = vpack.c.bf16 %v322, %v321
    %v337 = vpack.c.bf16 %v324, %v323
    %v338 = vpack.c.bf16 %v326, %v325
    %v339 = vpack.c.bf16 %v328, %v327
    %v340 = vpack.c.bf16 %v330, %v329
    %v341 = vpack.c.bf16 %v332, %v331
    %v342 = vpack.c.bf16 %v334, %v333
    %v343 = vld [vmem:[%s2] sm:$0xf]
    %v344 = vld [vmem:[%s2 + $0x4] sm:$0xf]
    %v345 = vld [vmem:[%s2 + $0x8] sm:$0xf]
    %v346 = vld [vmem:[%s2 + $0xc] sm:$0xf]
    %v347 = vld [vmem:[%s2 + $0x10] sm:$0xf]
    %v348 = vld [vmem:[%s2 + $0x14] sm:$0xf]
    %v349 = vld [vmem:[%s2 + $0x18] sm:$0xf]
    %v350 = vld [vmem:[%s2 + $0x1c] sm:$0xf]
    %v351 = vld [vmem:[%s2 + $0x20] sm:$0xf]
    %v352 = vld [vmem:[%s2 + $0x24] sm:$0xf]
    %v353 = vld [vmem:[%s2 + $0x28] sm:$0xf]
    %v354 = vld [vmem:[%s2 + $0x2c] sm:$0xf]
    %v355 = vld [vmem:[%s2 + $0x30] sm:$0xf]
    %v356 = vld [vmem:[%s2 + $0x34] sm:$0xf]
    %v357 = vld [vmem:[%s2 + $0x38] sm:$0xf]
    %v358 = vld [vmem:[%s2 + $0x3c] sm:$0xf]
    %v359 = vld [vmem:[%s3] sm:$0x1]
    %v361 = vlaneseq
    %v362 = vshrl.u32 %v361, 7
    %v363 = vsub.s32 0, %v362
    %v364 = vrot.slane %v359, %v363
    %v382 = vunpack.c.l.b16 %v343
    %v383 = vunpack.c.l.b16 %v344
    %v384 = vunpack.c.l.b16 %v345
    %v385 = vunpack.c.l.b16 %v346
    %v386 = vunpack.c.l.b16 %v347
    %v387 = vunpack.c.l.b16 %v348
    %v388 = vunpack.c.l.b16 %v349
    %v389 = vunpack.c.l.b16 %v350
    %v390 = vunpack.c.l.b16 %v351
    %v391 = vunpack.c.l.b16 %v352
    %v392 = vunpack.c.l.b16 %v353
    %v393 = vunpack.c.l.b16 %v354
    %v394 = vunpack.c.l.b16 %v355
    %v395 = vunpack.c.l.b16 %v356
    %v396 = vunpack.c.l.b16 %v357
    %v397 = vunpack.c.l.b16 %v358
    %v398 = vpack.c.b16 %v383, %v382
    %v399 = vpack.c.b16 %v385, %v384
    %v400 = vpack.c.b16 %v387, %v386
    %v401 = vpack.c.b16 %v389, %v388
    %v402 = vpack.c.b16 %v391, %v390
    %v403 = vpack.c.b16 %v393, %v392
    %v404 = vpack.c.b16 %v395, %v394
    %v405 = vpack.c.b16 %v397, %v396
    %414 = vmatprep.subr.bf16.mxu0 0
    %415 = vmatpush1.bf16.msra.mxu0 %v398
    %416 = vmatprep.subr.bf16.mxu0 0
    %417 = vmatpush1.bf16.msra.mxu0 %v399
    %418 = vmatprep.subr.bf16.mxu0 0
    %419 = vmatpush1.bf16.msra.mxu0 %v400
    %420 = vmatprep.subr.bf16.mxu0 0
    %421 = vmatpush1.bf16.msra.mxu0 %v401
    %422 = vmatprep.subr.bf16.mxu0 0
    %423 = vmatpush1.bf16.msra.mxu0 %v402
    %424 = vmatprep.subr.bf16.mxu0 0
    %425 = vmatpush1.bf16.msra.mxu0 %v403
    %426 = vmatprep.subr.bf16.mxu0 0
    %427 = vmatpush1.bf16.msra.mxu0 %v404
    %428 = vmatprep.subr.bf16.mxu0 0
    %429 = vmatpush1.bf16.msra.mxu0 %v405
    %430 = vmatprep.subr.bf16.mxu0 0
    %431 = vmatpush1.bf16.msra.mxu0 0
    %432 = vmatprep.subr.bf16.mxu0 0
    %433 = vmatpush1.bf16.msra.mxu0 0
    %434 = vmatprep.subr.bf16.mxu0 0
    %435 = vmatpush1.bf16.msra.mxu0 0
    %436 = vmatprep.subr.bf16.mxu0 0
    %437 = vmatpush1.bf16.msra.mxu0 0
    %438 = vmatprep.subr.bf16.mxu0 0
    %439 = vmatpush1.bf16.msra.mxu0 0
    %440 = vmatprep.subr.bf16.mxu0 0
    %441 = vmatpush1.bf16.msra.mxu0 0
    %442 = vmatprep.subr.bf16.mxu0 0
    %443 = vmatpush1.bf16.msra.mxu0 0
    %444 = vmatprep.subr.bf16.mxu0 0
    %445 = vmatpush1.bf16.msra.mxu0 0
    %446 = vmatprep.mubr.bf16.mxu0 0
    %447 = vmatmul.mubr.bf16.gmra.mrb[0].mxu0 %v335
    %v448 = vpop.f32.mrb[0].mxu0
    %v449 = vadd.f32 %v364, %v448
    %v450 = vpop.f32.mrb[0].mxu0
    %v451 = vpop.f32.mrb[0].mxu0
    %v452 = vadd.f32 %v364, %v451
    %v453 = vpop.f32.mrb[0].mxu0
    %454 = vmatprep.mubr.bf16.mxu0 0
    %455 = vmatmul.mubr.bf16.gmra.mrb[0].mxu0 %v336
    %v456 = vpop.f32.mrb[0].mxu0
    %v457 = vadd.f32 %v364, %v456
    %v458 = vpop.f32.mrb[0].mxu0
    %v459 = vpop.f32.mrb[0].mxu0
    %v460 = vadd.f32 %v364, %v459
    %v461 = vpop.f32.mrb[0].mxu0
    %462 = vmatprep.mubr.bf16.mxu0 0
    %463 = vmatmul.mubr.bf16.gmra.mrb[0].mxu0 %v337
    %v464 = vpop.f32.mrb[0].mxu0
    %v465 = vadd.f32 %v364, %v464
    %v466 = vpop.f32.mrb[0].mxu0
    %v467 = vpop.f32.mrb[0].mxu0
    %v468 = vadd.f32 %v364, %v467
    %v469 = vpop.f32.mrb[0].mxu0
    %470 = vmatprep.mubr.bf16.mxu0 0
    %471 = vmatmul.mubr.bf16.gmra.mrb[0].mxu0 %v338
    %v472 = vpop.f32.mrb[0].mxu0
    %v473 = vadd.f32 %v364, %v472
    %v474 = vpop.f32.mrb[0].mxu0
    %v475 = vpop.f32.mrb[0].mxu0
    %v476 = vadd.f32 %v364, %v475
    %v477 = vpop.f32.mrb[0].mxu0
    %478 = vmatprep.mubr.bf16.mxu0 0
    %479 = vmatmul.mubr.bf16.gmra.mrb[0].mxu0 %v339
    %v480 = vpop.f32.mrb[0].mxu0
    %v481 = vadd.f32 %v364, %v480
    %v482 = vpop.f32.mrb[0].mxu0
    %v483 = vpop.f32.mrb[0].mxu0
    %v484 = vadd.f32 %v364, %v483
    %v485 = vpop.f32.mrb[0].mxu0
    %486 = vmatprep.mubr.bf16.mxu0 0
    %487 = vmatmul.mubr.bf16.gmra.mrb[0].mxu0 %v340
    %v488 = vpop.f32.mrb[0].mxu0
    %v489 = vadd.f32 %v364, %v488
    %v490 = vpop.f32.mrb[0].mxu0
    %v491 = vpop.f32.mrb[0].mxu0
    %v492 = vadd.f32 %v364, %v491
    %v493 = vpop.f32.mrb[0].mxu0
    %494 = vmatprep.mubr.bf16.mxu0 0
    %495 = vmatmul.mubr.bf16.gmra.mrb[0].mxu0 %v341
    %v496 = vpop.f32.mrb[0].mxu0
    %v497 = vadd.f32 %v364, %v496
    %v498 = vpop.f32.mrb[0].mxu0
    %v499 = vpop.f32.mrb[0].mxu0
    %v500 = vadd.f32 %v364, %v499
    %v501 = vpop.f32.mrb[0].mxu0
    %502 = vmatprep.mubr.bf16.mxu0 0
    %503 = vmatmul.mubr.bf16.gmra.mrb[0].mxu0 %v342
    %v504 = vpop.f32.mrb[0].mxu0
    %v505 = vadd.f32 %v364, %v504
    %v506 = vpop.f32.mrb[0].mxu0
    %v507 = vpop.f32.mrb[0].mxu0
    %v508 = vadd.f32 %v364, %v507
    %v509 = vpop.f32.mrb[0].mxu0
    %510 = vdwg.mxu0
    %v511 = vmax.f32 %v449, 0.0
    %v512 = vmax.f32 %v452, 0.0
    %v513 = vmax.f32 %v457, 0.0
    %v514 = vmax.f32 %v460, 0.0
    %v515 = vmax.f32 %v465, 0.0
    %v516 = vmax.f32 %v468, 0.0
    %v517 = vmax.f32 %v473, 0.0
    %v518 = vmax.f32 %v476, 0.0
    %v519 = vmax.f32 %v481, 0.0
    %v520 = vmax.f32 %v484, 0.0
    %v521 = vmax.f32 %v489, 0.0
    %v522 = vmax.f32 %v492, 0.0
    %v523 = vmax.f32 %v497, 0.0
    %v524 = vmax.f32 %v500, 0.0
    %v525 = vmax.f32 %v505, 0.0
    %v526 = vmax.f32 %v508, 0.0
    %527 = vst [vmem:[%s4] sm:$0xff] %v511
    %528 = vst [vmem:[%s4 + $0x8] sm:$0xff] %v512
    %529 = vst [vmem:[%s4 + $0x10] sm:$0xff] %v513
    %530 = vst [vmem:[%s4 + $0x18] sm:$0xff] %v514
    %531 = vst [vmem:[%s4 + $0x20] sm:$0xff] %v515
    %532 = vst [vmem:[%s4 + $0x28] sm:$0xff] %v516
    %533 = vst [vmem:[%s4 + $0x30] sm:$0xff] %v517
    %534 = vst [vmem:[%s4 + $0x38] sm:$0xff] %v518
    %535 = vst [vmem:[%s4 + $0x40] sm:$0xff] %v519
    %536 = vst [vmem:[%s4 + $0x48] sm:$0xff] %v520
    %537 = vst [vmem:[%s4 + $0x50] sm:$0xff] %v521
    %538 = vst [vmem:[%s4 + $0x58] sm:$0xff] %v522
    %539 = vst [vmem:[%s4 + $0x60] sm:$0xff] %v523
    %540 = vst [vmem:[%s4 + $0x68] sm:$0xff] %v524
    %541 = vst [vmem:[%s4 + $0x70] sm:$0xff] %v525
    %542 = vst [vmem:[%s4 + $0x78] sm:$0xff] %v526
  $region25: #{fused_gcn.3} parent=0 // pred_fallthru
    _
  // Predicated region
  $region26: #{fused_gcn.3} parent=0 // pred_check
    _
  $region27: #{fused_gcn.3} parent=0 // pred_check_branch
    %544 = sbr.rel (0) target = $region29
  $region28: #{fused_gcn.3} parent=0 // pred_region
    _
  $region29: #{fused_gcn.3} parent=0 // pred_fallthru
    _
  // Predicated region
  $region30: #{fused_gcn.3} parent=0 // pred_check
    _
  $region31: #{fused_gcn.3} parent=0 // pred_check_branch
    %546 = sbr.rel (0) target = $region33
  $region32: #{fused_gcn.3} parent=0 // pred_region
    _
  $region33: #{fused_gcn.3} parent=0 // pred_fallthru
    _

</llo_original>
